<compile_context>
chip_gen: v7x
topology: tpu7x:2x2x1
jax: 0.10.0
libtpu: 0.0.40
codegen_flags: <defaults>
</compile_context>

<pallas_src>
import functools

import jax
import jax.numpy as jnp
import numpy as np
from jax import lax
from jax.experimental import pallas as pl
from jax.experimental.pallas import tpu as pltpu


def _round_up(n, m):
  return ((n + m - 1) // m) * m


def _layout(style_dim, in_channels, out_channels, groups, style_kernel):
  """Static lane-layout constants shared by pack_params and the forward."""
  C = style_dim
  K = style_kernel
  P = K * K
  odw = out_channels * (in_channels // groups)
  opw = out_channels * (out_channels // groups)
  oc = out_channels
  dw_w = odw * P                       # dw region: lane = odw_idx * P + (y*K + x)
  pw_off = _round_up(dw_w, 128)        # pw region starts 128-aligned
  b_off = pw_off + _round_up(opw, 128) # bias region starts 128-aligned
  n_total = b_off + _round_up(oc, 128) # lane-dense (multiple of 128) matmul width
  return dict(C=C, K=K, P=P, odw=odw, opw=opw, oc=oc,
              dw_w=dw_w, pw_off=pw_off, b_off=b_off, n_total=n_total)


# ----------------------------- Pallas kernel -------------------------------


def _kernel_predictor_kernel(x_ref, wexp_ref, brow_ref,
                             dw_ref, pw_ref, bias_ref,
                             *, dw_w, pw_off, opw, b_off, oc):
  # Single MXU matmul covering all three predictor heads.
  res = jnp.dot(x_ref[...], wexp_ref[...],
                preferred_element_type=jnp.float32)        # (B, n_total)
  res = res + brow_ref[...]                                # fold all biases (VPU)
  # Split into the three heads; every region starts on a 128-aligned lane.
  dw_ref[...] = res[:, :dw_w]
  pw_ref[...] = res[:, pw_off:pw_off + opw]
  bias_ref[...] = res[:, b_off:b_off + oc]


# ------------------------------ packing -------------------------------------


def pack_params(params, style_dim, in_channels, out_channels, groups,
                style_kernel):
  """One-time (outside jit) expansion of the raw weights into a single matmul
  weight (C*K*K, n_total) plus a single bias row (1, n_total)."""
  L = _layout(style_dim, in_channels, out_channels, groups, style_kernel)
  C, K, P = L["C"], L["K"], L["P"]
  odw, opw, oc = L["odw"], L["opw"], L["oc"]
  CP = C * P

  Wexp = np.zeros((CP, L["n_total"]), np.float32)

  # --- 3x3 same-conv folded as an expanded weight ---------------------------
  # row index  = c*P + (qy*K + qx)   (flattened input pixel)
  # lane index = o*P + (py*K + px)   (flattened output pixel, odw-major)
  Wconv = np.asarray(params["W_dw"], np.float32)           # (odw, C, 3, 3) OIHW
  for py in range(K):
    for px in range(K):
      p = py * K + px
      for qy in range(K):
        for qx in range(K):
          ky, kx = qy - py + 1, qx - px + 1                # padding=1, 3x3 taps
          if 0 <= ky < 3 and 0 <= kx < 3:
            q = qy * K + qx
            Wexp[q:CP:P, p:L["dw_w"]:P] = Wconv[:, :, ky, kx].T

  # --- pooled branches: AdaptiveAvgPool2d((1,1)) == (1/P) * sum over pixels --
  Wpw = np.asarray(params["W_pw"], np.float32)             # (opw, C)
  Wb = np.asarray(params["W_b"], np.float32)               # (oc, C)
  for q in range(P):
    Wexp[q:CP:P, L["pw_off"]:L["pw_off"] + opw] = Wpw.T / float(P)
    Wexp[q:CP:P, L["b_off"]:L["b_off"] + oc] = Wb.T / float(P)

  # --- single bias row -------------------------------------------------------
  brow = np.zeros((1, L["n_total"]), np.float32)
  brow[0, :L["dw_w"]] = np.repeat(np.asarray(params["b_dw"], np.float32), P)
  brow[0, L["pw_off"]:L["pw_off"] + opw] = np.asarray(params["b_pw"], np.float32)
  brow[0, L["b_off"]:L["b_off"] + oc] = np.asarray(params["b_b"], np.float32)

  return {"W_exp": jnp.asarray(Wexp), "b_row": jnp.asarray(brow)}


# ------------------------------ forward --------------------------------------


@functools.partial(jax.jit, static_argnames=(
    "style_dim", "in_channels", "out_channels", "groups", "style_kernel",
    "fixed_batch_size"))
def kernel_predictor_forward(w, packed, *, style_dim, in_channels, out_channels,
                             groups, style_kernel, fixed_batch_size):
  B = fixed_batch_size
  L = _layout(style_dim, in_channels, out_channels, groups, style_kernel)
  K, P = L["K"], L["P"]
  assert w.shape == (B, L["C"], K, K)

  # The ONLY wrapper-side prep: flatten the style tensor to matmul rows.
  x = w.reshape(B, L["C"] * P)

  vmem = pl.BlockSpec(memory_space=pltpu.MemorySpace.VMEM)
  kernel = functools.partial(
      _kernel_predictor_kernel, dw_w=L["dw_w"], pw_off=L["pw_off"],
      opw=L["opw"], b_off=L["b_off"], oc=L["oc"])

  dw_flat, pw_flat, b_flat = pl.pallas_call(
      kernel,
      out_shape=(
          jax.ShapeDtypeStruct((B, L["dw_w"]), jnp.float32),
          jax.ShapeDtypeStruct((B, L["opw"]), jnp.float32),
          jax.ShapeDtypeStruct((B, L["oc"]), jnp.float32),
      ),
      in_specs=[vmem, vmem, vmem],
      out_specs=(vmem, vmem, vmem),
  )(x, packed["W_exp"], packed["b_row"])

  # Pure reshapes: lane layout already matches the module's output ordering.
  dw_kernel = dw_flat.reshape(B, out_channels, in_channels // groups, K, K)
  pw_kernel = pw_flat.reshape(B, out_channels, out_channels // groups, 1, 1)
  bias = b_flat.reshape(-1)
  return dw_kernel, pw_kernel, bias


# ------------------------- params / reference / main -------------------------


def init_params(key, style_dim, in_channels, out_channels, groups):
  odw = out_channels * (in_channels // groups)
  opw = out_channels * (out_channels // groups)
  ks = jax.random.split(key, 6)
  scale = 0.05
  return {
      "W_dw": scale * jax.random.normal(ks[0], (odw, style_dim, 3, 3), jnp.float32),
      "b_dw": scale * jax.random.normal(ks[1], (odw,), jnp.float32),
      "W_pw": scale * jax.random.normal(ks[2], (opw, style_dim), jnp.float32),
      "b_pw": scale * jax.random.normal(ks[3], (opw,), jnp.float32),
      "W_b": scale * jax.random.normal(ks[4], (out_channels, style_dim), jnp.float32),
      "b_b": scale * jax.random.normal(ks[5], (out_channels,), jnp.float32),
  }


def reference_forward(w, params, style_dim, in_channels, out_channels, groups,
                      style_kernel, B):
  odw = out_channels * (in_channels // groups)
  K = style_kernel
  dw = lax.conv_general_dilated(
      w, params["W_dw"], window_strides=(1, 1), padding=((1, 1), (1, 1)),
      dimension_numbers=("NCHW", "OIHW", "NCHW"))
  dw = dw + params["b_dw"].reshape(1, odw, 1, 1)
  dw = dw.reshape(B, out_channels, in_channels // groups, K, K)

  pooled = jnp.mean(w, axis=(2, 3))                          # (B, C)
  pw = pooled @ params["W_pw"].T + params["b_pw"]
  pw = pw.reshape(B, out_channels, out_channels // groups, 1, 1)
  bias = (pooled @ params["W_b"].T + params["b_b"]).reshape(-1)
  return dw, pw, bias


if __name__ == "__main__":
  # module config (small; spatial extent == style_kernel as the module implies)
  style_dim = 32
  in_channels = 16
  out_channels = 16
  groups = 4
  style_kernel = 3
  fixed_batch_size = 2

  key = jax.random.PRNGKey(0)
  k_w, k_p = jax.random.split(key)
  w = jax.random.normal(
      k_w, (fixed_batch_size, style_dim, style_kernel, style_kernel),
      jnp.float32)
  params = init_params(k_p, style_dim, in_channels, out_channels, groups)
  packed = pack_params(params, style_dim, in_channels, out_channels, groups,
                       style_kernel)
  packed = jax.tree_util.tree_map(jax.block_until_ready, packed)

  dw_k, pw_k, bias = kernel_predictor_forward(
      w, packed, style_dim=style_dim, in_channels=in_channels,
      out_channels=out_channels, groups=groups, style_kernel=style_kernel,
      fixed_batch_size=fixed_batch_size)
  jax.block_until_ready((dw_k, pw_k, bias))

  dw_r, pw_r, bias_r = reference_forward(
      w, params, style_dim, in_channels, out_channels, groups, style_kernel,
      fixed_batch_size)

  assert dw_k.shape == (fixed_batch_size, out_channels,
                        in_channels // groups, style_kernel, style_kernel)
  assert pw_k.shape == (fixed_batch_size, out_channels,
                        out_channels // groups, 1, 1)
  assert bias.shape == (fixed_batch_size * out_channels,)
  assert jnp.allclose(dw_k, dw_r, atol=1e-4, rtol=1e-4)
  assert jnp.allclose(pw_k, pw_r, atol=1e-4, rtol=1e-4)
  assert jnp.allclose(bias, bias_r, atol=1e-4, rtol=1e-4)

  print("KERNEL_OK")
</pallas_src>

<mosaic_0001>
module attributes {stable_mosaic.version = 11 : i64} {
  func.func @_kernel_predictor_kernel(%arg0: memref<2x288xf32, #tpu.memory_space<vmem>>, %arg1: memref<288x896xf32, #tpu.memory_space<vmem>>, %arg2: memref<1x896xf32, #tpu.memory_space<vmem>>, %arg3: memref<2x576xf32, #tpu.memory_space<vmem>>, %arg4: memref<2x64xf32, #tpu.memory_space<vmem>>, %arg5: memref<2x16xf32, #tpu.memory_space<vmem>>) attributes {dimension_semantics = [], scalar_prefetch = 0 : i64, scratch_operands = 0 : i64, tpu.core_type = #tpu.core_type<tc>} {
    %c0 = arith.constant 0 : index
    %c0_0 = arith.constant 0 : index
    %0 = vector.load %arg0[%c0, %c0_0] : memref<2x288xf32, #tpu.memory_space<vmem>>, vector<2x288xf32>
    %c0_1 = arith.constant 0 : index
    %c0_2 = arith.constant 0 : index
    %1 = vector.load %arg1[%c0_1, %c0_2] : memref<288x896xf32, #tpu.memory_space<vmem>>, vector<288x896xf32>
    %cst = arith.constant dense<0.000000e+00> : vector<2x896xf32>
    %2 = tpu.matmul %0, %1, %cst {dimension_numbers = #tpu.dot_dimension_numbers<[1], [0], [0], [1], [0, 0, 1, 1], [], []>} : vector<2x288xf32>, vector<288x896xf32>, vector<2x896xf32> -> vector<2x896xf32>
    %c0_3 = arith.constant 0 : index
    %c0_4 = arith.constant 0 : index
    %3 = vector.load %arg2[%c0_3, %c0_4] : memref<1x896xf32, #tpu.memory_space<vmem>>, vector<1x896xf32>
    %4 = vector.broadcast %3 : vector<1x896xf32> to vector<2x896xf32>
    %5 = arith.addf %2, %4 : vector<2x896xf32>
    %6 = vector.extract_strided_slice %5 {offsets = [0, 0], sizes = [2, 576], strides = [1, 1]} : vector<2x896xf32> to vector<2x576xf32>
    %c0_5 = arith.constant 0 : index
    %c0_6 = arith.constant 0 : index
    %7 = vector.load %arg3[%c0_5, %c0_6] : memref<2x576xf32, #tpu.memory_space<vmem>>, vector<2x576xf32>
    tpu.vector_store %arg3[%c0_5, %c0_6], %6 {strides = array<i32>} : memref<2x576xf32, #tpu.memory_space<vmem>>, vector<2x576xf32>,
    %8 = vector.extract_strided_slice %5 {offsets = [0, 640], sizes = [2, 64], strides = [1, 1]} : vector<2x896xf32> to vector<2x64xf32>
    %c0_7 = arith.constant 0 : index
    %c0_8 = arith.constant 0 : index
    %9 = vector.load %arg4[%c0_7, %c0_8] : memref<2x64xf32, #tpu.memory_space<vmem>>, vector<2x64xf32>
    tpu.vector_store %arg4[%c0_7, %c0_8], %8 {strides = array<i32>} : memref<2x64xf32, #tpu.memory_space<vmem>>, vector<2x64xf32>,
    %10 = vector.extract_strided_slice %5 {offsets = [0, 768], sizes = [2, 16], strides = [1, 1]} : vector<2x896xf32> to vector<2x16xf32>
    %c0_9 = arith.constant 0 : index
    %c0_10 = arith.constant 0 : index
    %11 = vector.load %arg5[%c0_9, %c0_10] : memref<2x16xf32, #tpu.memory_space<vmem>>, vector<2x16xf32>
    tpu.vector_store %arg5[%c0_9, %c0_10], %10 {strides = array<i32>} : memref<2x16xf32, #tpu.memory_space<vmem>>, vector<2x16xf32>,
    return
  }
}

</mosaic_0001>

<llo_original>
// kernel: kernel_predictor_forward.1
$region0: #{kernel_predictor_forward.1}
  #allocation0 [shape = 'u32[]', space=smem, size = 0x4, offset = 0x4, fixed_abs, tag = 'smem constant byte address 0x4 - core index']
  #allocation1 [shape = 'u32[144,128]{1,0:T(1,128)}', space=vmem, size = 0x12000, scoped, tag = 'internal scratch']
  %s0 = inlined_call_operand.vmem [shape: f32[2,288], index: 0, kind: input, shape index: {}]
  %s1 = inlined_call_operand.hbm [shape: f32[288,896], index: 1, kind: input, shape index: {}]
  %s2 = inlined_call_operand.vmem [shape: f32[1,896], index: 2, kind: input, shape index: {}]
  %s3 = inlined_call_operand.vmem [shape: f32[2,576], index: 3, kind: output, shape index: {0}]
  %s4 = inlined_call_operand.vmem [shape: f32[2,64], index: 4, kind: output, shape index: {1}]
  %s5 = inlined_call_operand.vmem [shape: f32[2,16], index: 5, kind: output, shape index: {2}]
  %6 = xla_tuple %s3, %s4, %s5
  %s7 = sld [smem:[#allocation0]]
  $region42: #{kernel_predictor_forward.1} parent=0
    _
  %s9 = ssub.s32 1, %s7
  %s10 = scalar_select 0, %s9, %s7
  $region1: #{kernel_predictor_forward.1} parent=0
    #allocation2 [shape = 'u8[1032192]{0}', space=vmem, size = 0xfc000, scoped, tag = 'input window, operand 1, single buffered']
    #allocation3 [shape = 's32[1]{0}', space=sflag, size = 0x4, scoped, tag = 'scoped memory for kernel_predictor_forward.1']
    %11 = vsyncpa [#allocation3], 0
    // Predicated region
    $region2: #{kernel_predictor_forward.1} parent=1 // pred_check
      _
    $region3: #{kernel_predictor_forward.1} parent=1 // pred_check_branch
      %13 = sbr.rel (0) target = $region5
    $region4: #{kernel_predictor_forward.1} parent=1 // pred_region
      _
    $region5: #{kernel_predictor_forward.1} parent=1 // pred_fallthru
      _
    // Predicated region
    $region6: #{kernel_predictor_forward.1} parent=1 // pred_check
      _
    $region7: #{kernel_predictor_forward.1} parent=1 // pred_check_branch
      %15 = sbr.rel (0) target = $region9
    $region8: #{kernel_predictor_forward.1} parent=1 // pred_region
      %s17 = ssub.s32 32256, 32256
      %18 = vsyncadd [#allocation3], %s17
      %s19 = sshll.u32 [#allocation2], 4
      %s20 = int_to_ptr.vmem [resolvable:$true] %s19
      %25 = dma.hbm_to_vmem [thread:$0]  %s1, 32256, %s20, [#allocation3], 896, 896, 56
    $region9: #{kernel_predictor_forward.1} parent=1 // pred_fallthru
      _
    // Predicated region
    $region10: #{kernel_predictor_forward.1} parent=1 // pred_check
      _
    $region11: #{kernel_predictor_forward.1} parent=1 // pred_check_branch
      %27 = sbr.rel (0) target = $region13
    $region12: #{kernel_predictor_forward.1} parent=1 // pred_region
      _
    $region13: #{kernel_predictor_forward.1} parent=1 // pred_fallthru
      _
    // Predicated region
    $region14: #{kernel_predictor_forward.1} parent=1 // pred_check
      _
    $region15: #{kernel_predictor_forward.1} parent=1 // pred_check_branch
      %29 = sbr.rel (0) target = $region17
    $region16: #{kernel_predictor_forward.1} parent=1 // pred_region
      %30 = dma.done [#allocation3], 32256
    $region17: #{kernel_predictor_forward.1} parent=1 // pred_fallthru
      _
    %v31 = vld [vmem:[%s0] sm:$0x3f]
    %v32 = vld [vmem:[#allocation2] sm:$0xff]
    %v33 = vld [vmem:[#allocation2 + $0x8] sm:$0xff]
    %v34 = vld [vmem:[#allocation2 + $0x10] sm:$0xff]
    %v35 = vld [vmem:[#allocation2 + $0x18] sm:$0xff]
    %v36 = vld [vmem:[#allocation2 + $0x20] sm:$0xff]
    %v37 = vld [vmem:[#allocation2 + $0x28] sm:$0xff]
    %v38 = vld [vmem:[#allocation2 + $0x30] sm:$0xff]
    %v39 = vld [vmem:[#allocation2 + $0x38] sm:$0xff]
    %v40 = vld [vmem:[#allocation2 + $0x40] sm:$0xff]
    %v41 = vld [vmem:[#allocation2 + $0x48] sm:$0xff]
    %v42 = vld [vmem:[#allocation2 + $0x50] sm:$0xff]
    %v43 = vld [vmem:[#allocation2 + $0x58] sm:$0xff]
    %v44 = vld [vmem:[#allocation2 + $0x60] sm:$0xff]
    %v45 = vld [vmem:[#allocation2 + $0x68] sm:$0xff]
    %v46 = vld [vmem:[#allocation2 + $0x70] sm:$0xff]
    %v47 = vld [vmem:[#allocation2 + $0x78] sm:$0xff]
    %v48 = vld [vmem:[#allocation2 + $0x80] sm:$0xff]
    %v49 = vld [vmem:[#allocation2 + $0x88] sm:$0xff]
    %v50 = vld [vmem:[#allocation2 + $0x90] sm:$0xff]
    %v51 = vld [vmem:[#allocation2 + $0x98] sm:$0xff]
    %v52 = vld [vmem:[#allocation2 + $0xa0] sm:$0xff]
    %v53 = vld [vmem:[#allocation2 + $0xa8] sm:$0xff]
    %v54 = vld [vmem:[#allocation2 + $0xb0] sm:$0xff]
    %v55 = vld [vmem:[#allocation2 + $0xb8] sm:$0xff]
    %v56 = vld [vmem:[#allocation2 + $0xc0] sm:$0xff]
    %v57 = vld [vmem:[#allocation2 + $0xc8] sm:$0xff]
    %v58 = vld [vmem:[#allocation2 + $0xd0] sm:$0xff]
    %v59 = vld [vmem:[#allocation2 + $0xd8] sm:$0xff]
    %v60 = vld [vmem:[#allocation2 + $0xe0] sm:$0xff]
    %v61 = vld [vmem:[#allocation2 + $0xe8] sm:$0xff]
    %v62 = vld [vmem:[#allocation2 + $0xf0] sm:$0xff]
    %v63 = vld [vmem:[#allocation2 + $0xf8] sm:$0xff]
    %v64 = vld [vmem:[#allocation2 + $0x100] sm:$0xff]
    %v65 = vld [vmem:[#allocation2 + $0x108] sm:$0xff]
    %v66 = vld [vmem:[#allocation2 + $0x110] sm:$0xff]
    %v67 = vld [vmem:[#allocation2 + $0x118] sm:$0xff]
    %v68 = vld [vmem:[#allocation2 + $0x120] sm:$0xff]
    %v69 = vld [vmem:[#allocation2 + $0x128] sm:$0xff]
    %v70 = vld [vmem:[#allocation2 + $0x130] sm:$0xff]
    %v71 = vld [vmem:[#allocation2 + $0x138] sm:$0xff]
    %v72 = vld [vmem:[#allocation2 + $0x140] sm:$0xff]
    %v73 = vld [vmem:[#allocation2 + $0x148] sm:$0xff]
    %v74 = vld [vmem:[#allocation2 + $0x150] sm:$0xff]
    %v75 = vld [vmem:[#allocation2 + $0x158] sm:$0xff]
    %v76 = vld [vmem:[#allocation2 + $0x160] sm:$0xff]
    %v77 = vld [vmem:[#allocation2 + $0x168] sm:$0xff]
    %v78 = vld [vmem:[#allocation2 + $0x170] sm:$0xff]
    %v79 = vld [vmem:[#allocation2 + $0x178] sm:$0xff]
    %v80 = vld [vmem:[#allocation2 + $0x180] sm:$0xff]
    %v81 = vld [vmem:[#allocation2 + $0x188] sm:$0xff]
    %v82 = vld [vmem:[#allocation2 + $0x190] sm:$0xff]
    %v83 = vld [vmem:[#allocation2 + $0x198] sm:$0xff]
    %v84 = vld [vmem:[#allocation2 + $0x1a0] sm:$0xff]
    %v85 = vld [vmem:[#allocation2 + $0x1a8] sm:$0xff]
    %v86 = vld [vmem:[#allocation2 + $0x1b0] sm:$0xff]
    %v87 = vld [vmem:[#allocation2 + $0x1b8] sm:$0xff]
    %v88 = vld [vmem:[#allocation2 + $0x1c0] sm:$0xff]
    %v89 = vld [vmem:[#allocation2 + $0x1c8] sm:$0xff]
    %v90 = vld [vmem:[#allocation2 + $0x1d0] sm:$0xff]
    %v91 = vld [vmem:[#allocation2 + $0x1d8] sm:$0xff]
    %v92 = vld [vmem:[#allocation2 + $0x1e0] sm:$0xff]
    %v93 = vld [vmem:[#allocation2 + $0x1e8] sm:$0xff]
    %v94 = vld [vmem:[#allocation2 + $0x1f0] sm:$0xff]
    %v95 = vld [vmem:[#allocation2 + $0x1f8] sm:$0xff]
    %v96 = vld [vmem:[#allocation2 + $0x200] sm:$0xff]
    %v97 = vld [vmem:[#allocation2 + $0x208] sm:$0xff]
    %v98 = vld [vmem:[#allocation2 + $0x210] sm:$0xff]
    %v99 = vld [vmem:[#allocation2 + $0x218] sm:$0xff]
    %v100 = vld [vmem:[#allocation2 + $0x220] sm:$0xff]
    %v101 = vld [vmem:[#allocation2 + $0x228] sm:$0xff]
    %v102 = vld [vmem:[#allocation2 + $0x230] sm:$0xff]
    %v103 = vld [vmem:[#allocation2 + $0x238] sm:$0xff]
    %v104 = vld [vmem:[#allocation2 + $0x240] sm:$0xff]
    %v105 = vld [vmem:[#allocation2 + $0x248] sm:$0xff]
    %v106 = vld [vmem:[#allocation2 + $0x250] sm:$0xff]
    %v107 = vld [vmem:[#allocation2 + $0x258] sm:$0xff]
    %v108 = vld [vmem:[#allocation2 + $0x260] sm:$0xff]
    %v109 = vld [vmem:[#allocation2 + $0x268] sm:$0xff]
    %v110 = vld [vmem:[#allocation2 + $0x270] sm:$0xff]
    %v111 = vld [vmem:[#allocation2 + $0x278] sm:$0xff]
    %v112 = vld [vmem:[#allocation2 + $0x280] sm:$0xff]
    %v113 = vld [vmem:[#allocation2 + $0x288] sm:$0xff]
    %v114 = vld [vmem:[#allocation2 + $0x290] sm:$0xff]
    %v115 = vld [vmem:[#allocation2 + $0x298] sm:$0xff]
    %v116 = vld [vmem:[#allocation2 + $0x2a0] sm:$0xff]
    %v117 = vld [vmem:[#allocation2 + $0x2a8] sm:$0xff]
    %v118 = vld [vmem:[#allocation2 + $0x2b0] sm:$0xff]
    %v119 = vld [vmem:[#allocation2 + $0x2b8] sm:$0xff]
    %v120 = vld [vmem:[#allocation2 + $0x2c0] sm:$0xff]
    %v121 = vld [vmem:[#allocation2 + $0x2c8] sm:$0xff]
    %v122 = vld [vmem:[#allocation2 + $0x2d0] sm:$0xff]
    %v123 = vld [vmem:[#allocation2 + $0x2d8] sm:$0xff]
    %v124 = vld [vmem:[#allocation2 + $0x2e0] sm:$0xff]
    %v125 = vld [vmem:[#allocation2 + $0x2e8] sm:$0xff]
    %v126 = vld [vmem:[#allocation2 + $0x2f0] sm:$0xff]
    %v127 = vld [vmem:[#allocation2 + $0x2f8] sm:$0xff]
    %v128 = vld [vmem:[#allocation2 + $0x300] sm:$0xff]
    %v129 = vld [vmem:[#allocation2 + $0x308] sm:$0xff]
    %v130 = vld [vmem:[#allocation2 + $0x310] sm:$0xff]
    %v131 = vld [vmem:[#allocation2 + $0x318] sm:$0xff]
    %v132 = vld [vmem:[#allocation2 + $0x320] sm:$0xff]
    %v133 = vld [vmem:[#allocation2 + $0x328] sm:$0xff]
    %v134 = vld [vmem:[#allocation2 + $0x330] sm:$0xff]
    %v135 = vld [vmem:[#allocation2 + $0x338] sm:$0xff]
    %v136 = vld [vmem:[#allocation2 + $0x340] sm:$0xff]
    %v137 = vld [vmem:[#allocation2 + $0x348] sm:$0xff]
    %v138 = vld [vmem:[#allocation2 + $0x350] sm:$0xff]
    %v139 = vld [vmem:[#allocation2 + $0x358] sm:$0xff]
    %v140 = vld [vmem:[#allocation2 + $0x360] sm:$0xff]
    %v141 = vld [vmem:[#allocation2 + $0x368] sm:$0xff]
    %v142 = vld [vmem:[#allocation2 + $0x370] sm:$0xff]
    %v143 = vld [vmem:[#allocation2 + $0x378] sm:$0xff]
    %v144 = vld [vmem:[#allocation2 + $0x380] sm:$0xff]
    %v145 = vld [vmem:[#allocation2 + $0x388] sm:$0xff]
    %v146 = vld [vmem:[#allocation2 + $0x390] sm:$0xff]
    %v147 = vld [vmem:[#allocation2 + $0x398] sm:$0xff]
    %v148 = vld [vmem:[#allocation2 + $0x3a0] sm:$0xff]
    %v149 = vld [vmem:[#allocation2 + $0x3a8] sm:$0xff]
    %v150 = vld [vmem:[#allocation2 + $0x3b0] sm:$0xff]
    %v151 = vld [vmem:[#allocation2 + $0x3b8] sm:$0xff]
    %v152 = vld [vmem:[#allocation2 + $0x3c0] sm:$0xff]
    %v153 = vld [vmem:[#allocation2 + $0x3c8] sm:$0xff]
    %v154 = vld [vmem:[#allocation2 + $0x3d0] sm:$0xff]
    %v155 = vld [vmem:[#allocation2 + $0x3d8] sm:$0xff]
    %v156 = vld [vmem:[#allocation2 + $0x3e0] sm:$0xff]
    %v157 = vld [vmem:[#allocation2 + $0x3e8] sm:$0xff]
    %v158 = vld [vmem:[#allocation2 + $0x3f0] sm:$0xff]
    %v159 = vld [vmem:[#allocation2 + $0x3f8] sm:$0xff]
    %v160 = vld [vmem:[#allocation2 + $0x400] sm:$0xff]
    %v161 = vld [vmem:[#allocation2 + $0x408] sm:$0xff]
    %v162 = vld [vmem:[#allocation2 + $0x410] sm:$0xff]
    %v163 = vld [vmem:[#allocation2 + $0x418] sm:$0xff]
    %v164 = vld [vmem:[#allocation2 + $0x420] sm:$0xff]
    %v165 = vld [vmem:[#allocation2 + $0x428] sm:$0xff]
    %v166 = vld [vmem:[#allocation2 + $0x430] sm:$0xff]
    %v167 = vld [vmem:[#allocation2 + $0x438] sm:$0xff]
    %v168 = vld [vmem:[#allocation2 + $0x440] sm:$0xff]
    %v169 = vld [vmem:[#allocation2 + $0x448] sm:$0xff]
    %v170 = vld [vmem:[#allocation2 + $0x450] sm:$0xff]
    %v171 = vld [vmem:[#allocation2 + $0x458] sm:$0xff]
    %v172 = vld [vmem:[#allocation2 + $0x460] sm:$0xff]
    %v173 = vld [vmem:[#allocation2 + $0x468] sm:$0xff]
    %v174 = vld [vmem:[#allocation2 + $0x470] sm:$0xff]
    %v175 = vld [vmem:[#allocation2 + $0x478] sm:$0xff]
    %v176 = vld [vmem:[#allocation2 + $0x480] sm:$0xff]
    %v177 = vld [vmem:[#allocation2 + $0x488] sm:$0xff]
    %v178 = vld [vmem:[#allocation2 + $0x490] sm:$0xff]
    %v179 = vld [vmem:[#allocation2 + $0x498] sm:$0xff]
    %v180 = vld [vmem:[#allocation2 + $0x4a0] sm:$0xff]
    %v181 = vld [vmem:[#allocation2 + $0x4a8] sm:$0xff]
    %v182 = vld [vmem:[#allocation2 + $0x4b0] sm:$0xff]
    %v183 = vld [vmem:[#allocation2 + $0x4b8] sm:$0xff]
    %v184 = vld [vmem:[#allocation2 + $0x4c0] sm:$0xff]
    %v185 = vld [vmem:[#allocation2 + $0x4c8] sm:$0xff]
    %v186 = vld [vmem:[#allocation2 + $0x4d0] sm:$0xff]
    %v187 = vld [vmem:[#allocation2 + $0x4d8] sm:$0xff]
    %v188 = vld [vmem:[#allocation2 + $0x4e0] sm:$0xff]
    %v189 = vld [vmem:[#allocation2 + $0x4e8] sm:$0xff]
    %v190 = vld [vmem:[#allocation2 + $0x4f0] sm:$0xff]
    %v191 = vld [vmem:[#allocation2 + $0x4f8] sm:$0xff]
    %v192 = vld [vmem:[#allocation2 + $0x500] sm:$0xff]
    %v193 = vld [vmem:[#allocation2 + $0x508] sm:$0xff]
    %v194 = vld [vmem:[#allocation2 + $0x510] sm:$0xff]
    %v195 = vld [vmem:[#allocation2 + $0x518] sm:$0xff]
    %v196 = vld [vmem:[#allocation2 + $0x520] sm:$0xff]
    %v197 = vld [vmem:[#allocation2 + $0x528] sm:$0xff]
    %v198 = vld [vmem:[#allocation2 + $0x530] sm:$0xff]
    %v199 = vld [vmem:[#allocation2 + $0x538] sm:$0xff]
    %v200 = vld [vmem:[#allocation2 + $0x540] sm:$0xff]
    %v201 = vld [vmem:[#allocation2 + $0x548] sm:$0xff]
    %v202 = vld [vmem:[#allocation2 + $0x550] sm:$0xff]
    %v203 = vld [vmem:[#allocation2 + $0x558] sm:$0xff]
    %v204 = vld [vmem:[#allocation2 + $0x560] sm:$0xff]
    %v205 = vld [vmem:[#allocation2 + $0x568] sm:$0xff]
    %v206 = vld [vmem:[#allocation2 + $0x570] sm:$0xff]
    %v207 = vld [vmem:[#allocation2 + $0x578] sm:$0xff]
    %v208 = vld [vmem:[#allocation2 + $0x580] sm:$0xff]
    %v209 = vld [vmem:[#allocation2 + $0x588] sm:$0xff]
    %v210 = vld [vmem:[#allocation2 + $0x590] sm:$0xff]
    %v211 = vld [vmem:[#allocation2 + $0x598] sm:$0xff]
    %v212 = vld [vmem:[#allocation2 + $0x5a0] sm:$0xff]
    %v213 = vld [vmem:[#allocation2 + $0x5a8] sm:$0xff]
    %v214 = vld [vmem:[#allocation2 + $0x5b0] sm:$0xff]
    %v215 = vld [vmem:[#allocation2 + $0x5b8] sm:$0xff]
    %v216 = vld [vmem:[#allocation2 + $0x5c0] sm:$0xff]
    %v217 = vld [vmem:[#allocation2 + $0x5c8] sm:$0xff]
    %v218 = vld [vmem:[#allocation2 + $0x5d0] sm:$0xff]
    %v219 = vld [vmem:[#allocation2 + $0x5d8] sm:$0xff]
    %v220 = vld [vmem:[#allocation2 + $0x5e0] sm:$0xff]
    %v221 = vld [vmem:[#allocation2 + $0x5e8] sm:$0xff]
    %v222 = vld [vmem:[#allocation2 + $0x5f0] sm:$0xff]
    %v223 = vld [vmem:[#allocation2 + $0x5f8] sm:$0xff]
    %v224 = vld [vmem:[#allocation2 + $0x600] sm:$0xff]
    %v225 = vld [vmem:[#allocation2 + $0x608] sm:$0xff]
    %v226 = vld [vmem:[#allocation2 + $0x610] sm:$0xff]
    %v227 = vld [vmem:[#allocation2 + $0x618] sm:$0xff]
    %v228 = vld [vmem:[#allocation2 + $0x620] sm:$0xff]
    %v229 = vld [vmem:[#allocation2 + $0x628] sm:$0xff]
    %v230 = vld [vmem:[#allocation2 + $0x630] sm:$0xff]
    %v231 = vld [vmem:[#allocation2 + $0x638] sm:$0xff]
    %v232 = vld [vmem:[#allocation2 + $0x640] sm:$0xff]
    %v233 = vld [vmem:[#allocation2 + $0x648] sm:$0xff]
    %v234 = vld [vmem:[#allocation2 + $0x650] sm:$0xff]
    %v235 = vld [vmem:[#allocation2 + $0x658] sm:$0xff]
    %v236 = vld [vmem:[#allocation2 + $0x660] sm:$0xff]
    %v237 = vld [vmem:[#allocation2 + $0x668] sm:$0xff]
    %v238 = vld [vmem:[#allocation2 + $0x670] sm:$0xff]
    %v239 = vld [vmem:[#allocation2 + $0x678] sm:$0xff]
    %v240 = vld [vmem:[#allocation2 + $0x680] sm:$0xff]
    %v241 = vld [vmem:[#allocation2 + $0x688] sm:$0xff]
    %v242 = vld [vmem:[#allocation2 + $0x690] sm:$0xff]
    %v243 = vld [vmem:[#allocation2 + $0x698] sm:$0xff]
    %v244 = vld [vmem:[#allocation2 + $0x6a0] sm:$0xff]
    %v245 = vld [vmem:[#allocation2 + $0x6a8] sm:$0xff]
    %v246 = vld [vmem:[#allocation2 + $0x6b0] sm:$0xff]
    %v247 = vld [vmem:[#allocation2 + $0x6b8] sm:$0xff]
    %v248 = vld [vmem:[#allocation2 + $0x6c0] sm:$0xff]
    %v249 = vld [vmem:[#allocation2 + $0x6c8] sm:$0xff]
    %v250 = vld [vmem:[#allocation2 + $0x6d0] sm:$0xff]
    %v251 = vld [vmem:[#allocation2 + $0x6d8] sm:$0xff]
    %v252 = vld [vmem:[#allocation2 + $0x6e0] sm:$0xff]
    %v253 = vld [vmem:[#allocation2 + $0x6e8] sm:$0xff]
    %v254 = vld [vmem:[#allocation2 + $0x6f0] sm:$0xff]
    %v255 = vld [vmem:[#allocation2 + $0x6f8] sm:$0xff]
    %v256 = vld [vmem:[#allocation2 + $0x700] sm:$0xff]
    %v257 = vld [vmem:[#allocation2 + $0x708] sm:$0xff]
    %v258 = vld [vmem:[#allocation2 + $0x710] sm:$0xff]
    %v259 = vld [vmem:[#allocation2 + $0x718] sm:$0xff]
    %v260 = vld [vmem:[#allocation2 + $0x720] sm:$0xff]
    %v261 = vld [vmem:[#allocation2 + $0x728] sm:$0xff]
    %v262 = vld [vmem:[#allocation2 + $0x730] sm:$0xff]
    %v263 = vld [vmem:[#allocation2 + $0x738] sm:$0xff]
    %v264 = vld [vmem:[#allocation2 + $0x740] sm:$0xff]
    %v265 = vld [vmem:[#allocation2 + $0x748] sm:$0xff]
    %v266 = vld [vmem:[#allocation2 + $0x750] sm:$0xff]
    %v267 = vld [vmem:[#allocation2 + $0x758] sm:$0xff]
    %v268 = vld [vmem:[#allocation2 + $0x760] sm:$0xff]
    %v269 = vld [vmem:[#allocation2 + $0x768] sm:$0xff]
    %v270 = vld [vmem:[#allocation2 + $0x770] sm:$0xff]
    %v271 = vld [vmem:[#allocation2 + $0x778] sm:$0xff]
    %v272 = vld [vmem:[#allocation2 + $0x780] sm:$0xff]
    %v273 = vld [vmem:[#allocation2 + $0x788] sm:$0xff]
    %v274 = vld [vmem:[#allocation2 + $0x790] sm:$0xff]
    %v275 = vld [vmem:[#allocation2 + $0x798] sm:$0xff]
    %v276 = vld [vmem:[#allocation2 + $0x7a0] sm:$0xff]
    %v277 = vld [vmem:[#allocation2 + $0x7a8] sm:$0xff]
    %v278 = vld [vmem:[#allocation2 + $0x7b0] sm:$0xff]
    %v279 = vld [vmem:[#allocation2 + $0x7b8] sm:$0xff]
    %v280 = vld [vmem:[#allocation2 + $0x7c0] sm:$0xff]
    %v281 = vld [vmem:[#allocation2 + $0x7c8] sm:$0xff]
    %v282 = vld [vmem:[#allocation2 + $0x7d0] sm:$0xff]
    %v283 = vld [vmem:[#allocation2 + $0x7d8] sm:$0xff]
    %v284 = vld [vmem:[%s2] sm:$0xff]
    %v286 = vlaneseq
    %v287 = vshrl.u32 %v286, 7
    %v288 = vsub.s32 0, %v287
    %v289 = vrot.slane %v284, %v288
    %v290 = vlaneseq
    %v291 = vshrl.u32 %v290, 7
    %v292 = vsub.s32 1, %v291
    %v293 = vrot.slane %v284, %v292
    %v294 = vlaneseq
    %v295 = vshrl.u32 %v294, 7
    %v296 = vsub.s32 2, %v295
    %v297 = vrot.slane %v284, %v296
    %v298 = vlaneseq
    %v299 = vshrl.u32 %v298, 7
    %v300 = vsub.s32 3, %v299
    %v301 = vrot.slane %v284, %v300
    %v302 = vlaneseq
    %v303 = vshrl.u32 %v302, 7
    %v304 = vsub.s32 4, %v303
    %v305 = vrot.slane %v284, %v304
    %v306 = vlaneseq
    %v307 = vshrl.u32 %v306, 7
    %v308 = vsub.s32 5, %v307
    %v309 = vrot.slane %v284, %v308
    %v310 = vlaneseq
    %v311 = vshrl.u32 %v310, 7
    %v312 = vsub.s32 6, %v311
    %v313 = vrot.slane %v284, %v312
    %v322 = vcombine.high %v31, %v31
    %v324 = vunpack.c.l.s4 1983009808
    %v325 = vunpack.c.0.s8 %v324
    %v326 = vlaneseq
    %v327 = vshrl.u32 %v326, 7
    %v328 = vsub.s32 %v325, %v327
    %v329 = vrot.slane %v31, %v328
    %v331 = vunpack.c.l.s4 1983009808
    %v332 = vunpack.c.0.s8 %v331
    %v333 = vlaneseq
    %v334 = vshrl.u32 %v333, 7
    %v335 = vsub.s32 %v332, %v334
    %v336 = vrot.slane %v322, %v335
    %v337 = vcombine.high %v329, %v329
    %vm340 = vcmask 261120
    %v341 = vsel %vm340, %v336, 0
    %343 = vmatprep.subr.mxu0 %v33
    %344 = vmatpush1.msra.mxu0 %v32
    %345 = vmatprep.subr.mxu0 %v40
    %346 = vmatpush1.msra.mxu0 %v39
    %347 = vmatprep.subr.mxu0 %v47
    %348 = vmatpush1.msra.mxu0 %v46
    %349 = vmatprep.subr.mxu0 %v54
    %350 = vmatpush1.msra.mxu0 %v53
    %351 = vmatprep.subr.mxu0 %v61
    %352 = vmatpush1.msra.mxu0 %v60
    %353 = vmatprep.subr.mxu0 %v68
    %354 = vmatpush1.msra.mxu0 %v67
    %355 = vmatprep.subr.mxu0 %v75
    %356 = vmatpush1.msra.mxu0 %v74
    %357 = vmatprep.subr.mxu0 %v82
    %358 = vmatpush1.msra.mxu0 %v81
    %359 = vmatprep.subr.mxu0 %v89
    %360 = vmatpush1.msra.mxu0 %v88
    %361 = vmatprep.subr.mxu0 %v96
    %362 = vmatpush1.msra.mxu0 %v95
    %363 = vmatprep.subr.mxu0 %v103
    %364 = vmatpush1.msra.mxu0 %v102
    %365 = vmatprep.subr.mxu0 %v110
    %366 = vmatpush1.msra.mxu0 %v109
    %367 = vmatprep.subr.mxu0 %v117
    %368 = vmatpush1.msra.mxu0 %v116
    %369 = vmatprep.subr.mxu0 %v124
    %370 = vmatpush1.msra.mxu0 %v123
    %371 = vmatprep.subr.mxu0 %v131
    %372 = vmatpush1.msra.mxu0 %v130
    %373 = vmatprep.subr.mxu0 %v138
    %374 = vmatpush1.msra.mxu0 %v137
    %375 = vmatprep.subr.mxu0 %v145
    %376 = vmatpush1.msra.mxu0 %v144
    %377 = vmatprep.subr.mxu0 %v152
    %378 = vmatpush1.msra.mxu0 %v151
    %379 = vmatprep.subr.mxu0 %v159
    %380 = vmatpush1.msra.mxu0 %v158
    %381 = vmatprep.subr.mxu0 %v166
    %382 = vmatpush1.msra.mxu0 %v165
    %383 = vmatprep.subr.mxu0 %v173
    %384 = vmatpush1.msra.mxu0 %v172
    %385 = vmatprep.subr.mxu0 %v180
    %386 = vmatpush1.msra.mxu0 %v179
    %387 = vmatprep.subr.mxu0 %v187
    %388 = vmatpush1.msra.mxu0 %v186
    %389 = vmatprep.subr.mxu0 %v194
    %390 = vmatpush1.msra.mxu0 %v193
    %391 = vmatprep.subr.mxu0 %v201
    %392 = vmatpush1.msra.mxu0 %v200
    %393 = vmatprep.subr.mxu0 %v208
    %394 = vmatpush1.msra.mxu0 %v207
    %395 = vmatprep.subr.mxu0 %v215
    %396 = vmatpush1.msra.mxu0 %v214
    %397 = vmatprep.subr.mxu0 %v222
    %398 = vmatpush1.msra.mxu0 %v221
    %399 = vmatprep.subr.mxu0 %v229
    %400 = vmatpush1.msra.mxu0 %v228
    %401 = vmatprep.subr.mxu0 %v236
    %402 = vmatpush1.msra.mxu0 %v235
    %403 = vmatprep.subr.mxu0 %v243
    %404 = vmatpush1.msra.mxu0 %v242
    %405 = vmatprep.subr.mxu0 %v250
    %406 = vmatpush1.msra.mxu0 %v249
    %407 = vmatprep.mubr.f32.mxu0 %v337
    %408 = vmatmul.mubr.f32.gmra.mrb[0].mxu0 %v329
    %v409 = vpop.f32.mrb[0].mxu0
    %v410 = vadd.f32 %v289, %v409
    %v411 = vpop.f32.mrb[0].mxu0
    %v412 = vadd.f32 %v293, %v411
    %413 = vdwg.mxu0
    %414 = vmatprep.subr.mxu0 %v257
    %415 = vmatpush1.msra.mxu0 %v256
    %416 = vmatprep.subr.mxu0 %v264
    %417 = vmatpush1.msra.mxu0 %v263
    %418 = vmatprep.subr.mxu0 %v271
    %419 = vmatpush1.msra.mxu0 %v270
    %420 = vmatprep.subr.mxu0 %v278
    %421 = vmatpush1.msra.mxu0 %v277
    %422 = vmatprep.subr.mxu0 0.0
    %423 = vmatpush1.msra.mxu0 0.0
    %424 = vmatprep.subr.mxu0 0.0
    %425 = vmatpush1.msra.mxu0 0.0
    %426 = vmatprep.subr.mxu0 0.0
    %427 = vmatpush1.msra.mxu0 0.0
    %428 = vmatprep.subr.mxu0 0.0
    %429 = vmatpush1.msra.mxu0 0.0
    %430 = vmatprep.subr.mxu0 0.0
    %431 = vmatpush1.msra.mxu0 0.0
    %432 = vmatprep.subr.mxu0 0.0
    %433 = vmatpush1.msra.mxu0 0.0
    %434 = vmatprep.subr.mxu0 0.0
    %435 = vmatpush1.msra.mxu0 0.0
    %436 = vmatprep.subr.mxu0 0.0
    %437 = vmatpush1.msra.mxu0 0.0
    %438 = vmatprep.subr.mxu0 0.0
    %439 = vmatpush1.msra.mxu0 0.0
    %440 = vmatprep.subr.mxu0 0.0
    %441 = vmatpush1.msra.mxu0 0.0
    %442 = vmatprep.subr.mxu0 0.0
    %443 = vmatpush1.msra.mxu0 0.0
    %444 = vmatprep.subr.mxu0 0.0
    %445 = vmatpush1.msra.mxu0 0.0
    %446 = vmatprep.subr.mxu0 0.0
    %447 = vmatpush1.msra.mxu0 0.0
    %448 = vmatprep.subr.mxu0 0.0
    %449 = vmatpush1.msra.mxu0 0.0
    %450 = vmatprep.subr.mxu0 0.0
    %451 = vmatpush1.msra.mxu0 0.0
    %452 = vmatprep.subr.mxu0 0.0
    %453 = vmatpush1.msra.mxu0 0.0
    %454 = vmatprep.subr.mxu0 0.0
    %455 = vmatpush1.msra.mxu0 0.0
    %456 = vmatprep.subr.mxu0 0.0
    %457 = vmatpush1.msra.mxu0 0.0
    %458 = vmatprep.subr.mxu0 0.0
    %459 = vmatpush1.msra.mxu0 0.0
    %460 = vmatprep.subr.mxu0 0.0
    %461 = vmatpush1.msra.mxu0 0.0
    %462 = vmatprep.subr.mxu0 0.0
    %463 = vmatpush1.msra.mxu0 0.0
    %464 = vmatprep.subr.mxu0 0.0
    %465 = vmatpush1.msra.mxu0 0.0
    %466 = vmatprep.subr.mxu0 0.0
    %467 = vmatpush1.msra.mxu0 0.0
    %468 = vmatprep.subr.mxu0 0.0
    %469 = vmatpush1.msra.mxu0 0.0
    %470 = vmatprep.subr.mxu0 0.0
    %471 = vmatpush1.msra.mxu0 0.0
    %472 = vmatprep.subr.mxu0 0.0
    %473 = vmatpush1.msra.mxu0 0.0
    %474 = vmatprep.subr.mxu0 0.0
    %475 = vmatpush1.msra.mxu0 0.0
    %476 = vmatprep.subr.mxu0 0.0
    %477 = vmatpush1.msra.mxu0 0.0
    %478 = vmatprep.mubr.f32.mxu0 0.0
    %479 = vmatmul.mubr.f32.gmra.mrb[0].mxu0 %v341
    %v480 = vpop.f32.mrb[0].mxu0
    %v481 = vadd.f32 %v410, %v480
    %v482 = vpop.f32.mrb[0].mxu0
    %v483 = vadd.f32 %v412, %v482
    %484 = vdwg.mxu0
    %485 = vmatprep.subr.mxu0 %v35
    %486 = vmatpush1.msra.mxu0 %v34
    %487 = vmatprep.subr.mxu0 %v42
    %488 = vmatpush1.msra.mxu0 %v41
    %489 = vmatprep.subr.mxu0 %v49
    %490 = vmatpush1.msra.mxu0 %v48
    %491 = vmatprep.subr.mxu0 %v56
    %492 = vmatpush1.msra.mxu0 %v55
    %493 = vmatprep.subr.mxu0 %v63
    %494 = vmatpush1.msra.mxu0 %v62
    %495 = vmatprep.subr.mxu0 %v70
    %496 = vmatpush1.msra.mxu0 %v69
    %497 = vmatprep.subr.mxu0 %v77
    %498 = vmatpush1.msra.mxu0 %v76
    %499 = vmatprep.subr.mxu0 %v84
    %500 = vmatpush1.msra.mxu0 %v83
    %501 = vmatprep.subr.mxu0 %v91
    %502 = vmatpush1.msra.mxu0 %v90
    %503 = vmatprep.subr.mxu0 %v98
    %504 = vmatpush1.msra.mxu0 %v97
    %505 = vmatprep.subr.mxu0 %v105
    %506 = vmatpush1.msra.mxu0 %v104
    %507 = vmatprep.subr.mxu0 %v112
    %508 = vmatpush1.msra.mxu0 %v111
    %509 = vmatprep.subr.mxu0 %v119
    %510 = vmatpush1.msra.mxu0 %v118
    %511 = vmatprep.subr.mxu0 %v126
    %512 = vmatpush1.msra.mxu0 %v125
    %513 = vmatprep.subr.mxu0 %v133
    %514 = vmatpush1.msra.mxu0 %v132
    %515 = vmatprep.subr.mxu0 %v140
    %516 = vmatpush1.msra.mxu0 %v139
    %517 = vmatprep.subr.mxu0 %v147
    %518 = vmatpush1.msra.mxu0 %v146
    %519 = vmatprep.subr.mxu0 %v154
    %520 = vmatpush1.msra.mxu0 %v153
    %521 = vmatprep.subr.mxu0 %v161
    %522 = vmatpush1.msra.mxu0 %v160
    %523 = vmatprep.subr.mxu0 %v168
    %524 = vmatpush1.msra.mxu0 %v167
    %525 = vmatprep.subr.mxu0 %v175
    %526 = vmatpush1.msra.mxu0 %v174
    %527 = vmatprep.subr.mxu0 %v182
    %528 = vmatpush1.msra.mxu0 %v181
    %529 = vmatprep.subr.mxu0 %v189
    %530 = vmatpush1.msra.mxu0 %v188
    %531 = vmatprep.subr.mxu0 %v196
    %532 = vmatpush1.msra.mxu0 %v195
    %533 = vmatprep.subr.mxu0 %v203
    %534 = vmatpush1.msra.mxu0 %v202
    %535 = vmatprep.subr.mxu0 %v210
    %536 = vmatpush1.msra.mxu0 %v209
    %537 = vmatprep.subr.mxu0 %v217
    %538 = vmatpush1.msra.mxu0 %v216
    %539 = vmatprep.subr.mxu0 %v224
    %540 = vmatpush1.msra.mxu0 %v223
    %541 = vmatprep.subr.mxu0 %v231
    %542 = vmatpush1.msra.mxu0 %v230
    %543 = vmatprep.subr.mxu0 %v238
    %544 = vmatpush1.msra.mxu0 %v237
    %545 = vmatprep.subr.mxu0 %v245
    %546 = vmatpush1.msra.mxu0 %v244
    %547 = vmatprep.subr.mxu0 %v252
    %548 = vmatpush1.msra.mxu0 %v251
    %549 = vmatprep.mubr.f32.mxu0 %v337
    %550 = vmatmul.mubr.f32.gmra.mrb[0].mxu0 %v329
    %v551 = vpop.f32.mrb[0].mxu0
    %v552 = vadd.f32 %v297, %v551
    %v553 = vpop.f32.mrb[0].mxu0
    %v554 = vadd.f32 %v301, %v553
    %555 = vdwg.mxu0
    %556 = vmatprep.subr.mxu0 %v259
    %557 = vmatpush1.msra.mxu0 %v258
    %558 = vmatprep.subr.mxu0 %v266
    %559 = vmatpush1.msra.mxu0 %v265
    %560 = vmatprep.subr.mxu0 %v273
    %561 = vmatpush1.msra.mxu0 %v272
    %562 = vmatprep.subr.mxu0 %v280
    %563 = vmatpush1.msra.mxu0 %v279
    %564 = vmatprep.subr.mxu0 0.0
    %565 = vmatpush1.msra.mxu0 0.0
    %566 = vmatprep.subr.mxu0 0.0
    %567 = vmatpush1.msra.mxu0 0.0
    %568 = vmatprep.subr.mxu0 0.0
    %569 = vmatpush1.msra.mxu0 0.0
    %570 = vmatprep.subr.mxu0 0.0
    %571 = vmatpush1.msra.mxu0 0.0
    %572 = vmatprep.subr.mxu0 0.0
    %573 = vmatpush1.msra.mxu0 0.0
    %574 = vmatprep.subr.mxu0 0.0
    %575 = vmatpush1.msra.mxu0 0.0
    %576 = vmatprep.subr.mxu0 0.0
    %577 = vmatpush1.msra.mxu0 0.0
    %578 = vmatprep.subr.mxu0 0.0
    %579 = vmatpush1.msra.mxu0 0.0
    %580 = vmatprep.subr.mxu0 0.0
    %581 = vmatpush1.msra.mxu0 0.0
    %582 = vmatprep.subr.mxu0 0.0
    %583 = vmatpush1.msra.mxu0 0.0
    %584 = vmatprep.subr.mxu0 0.0
    %585 = vmatpush1.msra.mxu0 0.0
    %586 = vmatprep.subr.mxu0 0.0
    %587 = vmatpush1.msra.mxu0 0.0
    %588 = vmatprep.subr.mxu0 0.0
    %589 = vmatpush1.msra.mxu0 0.0
    %590 = vmatprep.subr.mxu0 0.0
    %591 = vmatpush1.msra.mxu0 0.0
    %592 = vmatprep.subr.mxu0 0.0
    %593 = vmatpush1.msra.mxu0 0.0
    %594 = vmatprep.subr.mxu0 0.0
    %595 = vmatpush1.msra.mxu0 0.0
    %596 = vmatprep.subr.mxu0 0.0
    %597 = vmatpush1.msra.mxu0 0.0
    %598 = vmatprep.subr.mxu0 0.0
    %599 = vmatpush1.msra.mxu0 0.0
    %600 = vmatprep.subr.mxu0 0.0
    %601 = vmatpush1.msra.mxu0 0.0
    %602 = vmatprep.subr.mxu0 0.0
    %603 = vmatpush1.msra.mxu0 0.0
    %604 = vmatprep.subr.mxu0 0.0
    %605 = vmatpush1.msra.mxu0 0.0
    %606 = vmatprep.subr.mxu0 0.0
    %607 = vmatpush1.msra.mxu0 0.0
    %608 = vmatprep.subr.mxu0 0.0
    %609 = vmatpush1.msra.mxu0 0.0
    %610 = vmatprep.subr.mxu0 0.0
    %611 = vmatpush1.msra.mxu0 0.0
    %612 = vmatprep.subr.mxu0 0.0
    %613 = vmatpush1.msra.mxu0 0.0
    %614 = vmatprep.subr.mxu0 0.0
    %615 = vmatpush1.msra.mxu0 0.0
    %616 = vmatprep.subr.mxu0 0.0
    %617 = vmatpush1.msra.mxu0 0.0
    %618 = vmatprep.subr.mxu0 0.0
    %619 = vmatpush1.msra.mxu0 0.0
    %620 = vmatprep.mubr.f32.mxu0 0.0
    %621 = vmatmul.mubr.f32.gmra.mrb[0].mxu0 %v341
    %v622 = vpop.f32.mrb[0].mxu0
    %v623 = vadd.f32 %v552, %v622
    %v624 = vpop.f32.mrb[0].mxu0
    %v625 = vadd.f32 %v554, %v624
    %626 = vdwg.mxu0
    %627 = vmatprep.subr.mxu0 %v37
    %628 = vmatpush1.msra.mxu0 %v36
    %629 = vmatprep.subr.mxu0 %v44
    %630 = vmatpush1.msra.mxu0 %v43
    %631 = vmatprep.subr.mxu0 %v51
    %632 = vmatpush1.msra.mxu0 %v50
    %633 = vmatprep.subr.mxu0 %v58
    %634 = vmatpush1.msra.mxu0 %v57
    %635 = vmatprep.subr.mxu0 %v65
    %636 = vmatpush1.msra.mxu0 %v64
    %637 = vmatprep.subr.mxu0 %v72
    %638 = vmatpush1.msra.mxu0 %v71
    %639 = vmatprep.subr.mxu0 %v79
    %640 = vmatpush1.msra.mxu0 %v78
    %641 = vmatprep.subr.mxu0 %v86
    %642 = vmatpush1.msra.mxu0 %v85
    %643 = vmatprep.subr.mxu0 %v93
    %644 = vmatpush1.msra.mxu0 %v92
    %645 = vmatprep.subr.mxu0 %v100
    %646 = vmatpush1.msra.mxu0 %v99
    %647 = vmatprep.subr.mxu0 %v107
    %648 = vmatpush1.msra.mxu0 %v106
    %649 = vmatprep.subr.mxu0 %v114
    %650 = vmatpush1.msra.mxu0 %v113
    %651 = vmatprep.subr.mxu0 %v121
    %652 = vmatpush1.msra.mxu0 %v120
    %653 = vmatprep.subr.mxu0 %v128
    %654 = vmatpush1.msra.mxu0 %v127
    %655 = vmatprep.subr.mxu0 %v135
    %656 = vmatpush1.msra.mxu0 %v134
    %657 = vmatprep.subr.mxu0 %v142
    %658 = vmatpush1.msra.mxu0 %v141
    %659 = vmatprep.subr.mxu0 %v149
    %660 = vmatpush1.msra.mxu0 %v148
    %661 = vmatprep.subr.mxu0 %v156
    %662 = vmatpush1.msra.mxu0 %v155
    %663 = vmatprep.subr.mxu0 %v163
    %664 = vmatpush1.msra.mxu0 %v162
    %665 = vmatprep.subr.mxu0 %v170
    %666 = vmatpush1.msra.mxu0 %v169
    %667 = vmatprep.subr.mxu0 %v177
    %668 = vmatpush1.msra.mxu0 %v176
    %669 = vmatprep.subr.mxu0 %v184
    %670 = vmatpush1.msra.mxu0 %v183
    %671 = vmatprep.subr.mxu0 %v191
    %672 = vmatpush1.msra.mxu0 %v190
    %673 = vmatprep.subr.mxu0 %v198
    %674 = vmatpush1.msra.mxu0 %v197
    %675 = vmatprep.subr.mxu0 %v205
    %676 = vmatpush1.msra.mxu0 %v204
    %677 = vmatprep.subr.mxu0 %v212
    %678 = vmatpush1.msra.mxu0 %v211
    %679 = vmatprep.subr.mxu0 %v219
    %680 = vmatpush1.msra.mxu0 %v218
    %681 = vmatprep.subr.mxu0 %v226
    %682 = vmatpush1.msra.mxu0 %v225
    %683 = vmatprep.subr.mxu0 %v233
    %684 = vmatpush1.msra.mxu0 %v232
    %685 = vmatprep.subr.mxu0 %v240
    %686 = vmatpush1.msra.mxu0 %v239
    %687 = vmatprep.subr.mxu0 %v247
    %688 = vmatpush1.msra.mxu0 %v246
    %689 = vmatprep.subr.mxu0 %v254
    %690 = vmatpush1.msra.mxu0 %v253
    %691 = vmatprep.mubr.f32.mxu0 %v337
    %692 = vmatmul.mubr.f32.gmra.mrb[0].mxu0 %v329
    %v693 = vpop.f32.mrb[0].mxu0
    %v694 = vadd.f32 %v305, %v693
    %v695 = vpop.f32.mrb[0].mxu0
    %v696 = vadd.f32 %v309, %v695
    %697 = vdwg.mxu0
    %698 = vmatprep.subr.mxu0 %v261
    %699 = vmatpush1.msra.mxu0 %v260
    %700 = vmatprep.subr.mxu0 %v268
    %701 = vmatpush1.msra.mxu0 %v267
    %702 = vmatprep.subr.mxu0 %v275
    %703 = vmatpush1.msra.mxu0 %v274
    %704 = vmatprep.subr.mxu0 %v282
    %705 = vmatpush1.msra.mxu0 %v281
    %706 = vmatprep.subr.mxu0 0.0
    %707 = vmatpush1.msra.mxu0 0.0
    %708 = vmatprep.subr.mxu0 0.0
    %709 = vmatpush1.msra.mxu0 0.0
    %710 = vmatprep.subr.mxu0 0.0
    %711 = vmatpush1.msra.mxu0 0.0
    %712 = vmatprep.subr.mxu0 0.0
    %713 = vmatpush1.msra.mxu0 0.0
    %714 = vmatprep.subr.mxu0 0.0
    %715 = vmatpush1.msra.mxu0 0.0
    %716 = vmatprep.subr.mxu0 0.0
    %717 = vmatpush1.msra.mxu0 0.0
    %718 = vmatprep.subr.mxu0 0.0
    %719 = vmatpush1.msra.mxu0 0.0
    %720 = vmatprep.subr.mxu0 0.0
    %721 = vmatpush1.msra.mxu0 0.0
    %722 = vmatprep.subr.mxu0 0.0
    %723 = vmatpush1.msra.mxu0 0.0
    %724 = vmatprep.subr.mxu0 0.0
    %725 = vmatpush1.msra.mxu0 0.0
    %726 = vmatprep.subr.mxu0 0.0
    %727 = vmatpush1.msra.mxu0 0.0
    %728 = vmatprep.subr.mxu0 0.0
    %729 = vmatpush1.msra.mxu0 0.0
    %730 = vmatprep.subr.mxu0 0.0
    %731 = vmatpush1.msra.mxu0 0.0
    %732 = vmatprep.subr.mxu0 0.0
    %733 = vmatpush1.msra.mxu0 0.0
    %734 = vmatprep.subr.mxu0 0.0
    %735 = vmatpush1.msra.mxu0 0.0
    %736 = vmatprep.subr.mxu0 0.0
    %737 = vmatpush1.msra.mxu0 0.0
    %738 = vmatprep.subr.mxu0 0.0
    %739 = vmatpush1.msra.mxu0 0.0
    %740 = vmatprep.subr.mxu0 0.0
    %741 = vmatpush1.msra.mxu0 0.0
    %742 = vmatprep.subr.mxu0 0.0
    %743 = vmatpush1.msra.mxu0 0.0
    %744 = vmatprep.subr.mxu0 0.0
    %745 = vmatpush1.msra.mxu0 0.0
    %746 = vmatprep.subr.mxu0 0.0
    %747 = vmatpush1.msra.mxu0 0.0
    %748 = vmatprep.subr.mxu0 0.0
    %749 = vmatpush1.msra.mxu0 0.0
    %750 = vmatprep.subr.mxu0 0.0
    %751 = vmatpush1.msra.mxu0 0.0
    %752 = vmatprep.subr.mxu0 0.0
    %753 = vmatpush1.msra.mxu0 0.0
    %754 = vmatprep.subr.mxu0 0.0
    %755 = vmatpush1.msra.mxu0 0.0
    %756 = vmatprep.subr.mxu0 0.0
    %757 = vmatpush1.msra.mxu0 0.0
    %758 = vmatprep.subr.mxu0 0.0
    %759 = vmatpush1.msra.mxu0 0.0
    %760 = vmatprep.subr.mxu0 0.0
    %761 = vmatpush1.msra.mxu0 0.0
    %762 = vmatprep.mubr.f32.mxu0 0.0
    %763 = vmatmul.mubr.f32.gmra.mrb[0].mxu0 %v341
    %v764 = vpop.f32.mrb[0].mxu0
    %v765 = vadd.f32 %v694, %v764
    %v766 = vpop.f32.mrb[0].mxu0
    %v767 = vadd.f32 %v696, %v766
    %768 = vdwg.mxu0
    %769 = vmatprep.subr.mxu0 0.0
    %770 = vmatpush1.msra.mxu0 %v38
    %771 = vmatprep.subr.mxu0 0.0
    %772 = vmatpush1.msra.mxu0 %v45
    %773 = vmatprep.subr.mxu0 0.0
    %774 = vmatpush1.msra.mxu0 %v52
    %775 = vmatprep.subr.mxu0 0.0
    %776 = vmatpush1.msra.mxu0 %v59
    %777 = vmatprep.subr.mxu0 0.0
    %778 = vmatpush1.msra.mxu0 %v66
    %779 = vmatprep.subr.mxu0 0.0
    %780 = vmatpush1.msra.mxu0 %v73
    %781 = vmatprep.subr.mxu0 0.0
    %782 = vmatpush1.msra.mxu0 %v80
    %783 = vmatprep.subr.mxu0 0.0
    %784 = vmatpush1.msra.mxu0 %v87
    %785 = vmatprep.subr.mxu0 0.0
    %786 = vmatpush1.msra.mxu0 %v94
    %787 = vmatprep.subr.mxu0 0.0
    %788 = vmatpush1.msra.mxu0 %v101
    %789 = vmatprep.subr.mxu0 0.0
    %790 = vmatpush1.msra.mxu0 %v108
    %791 = vmatprep.subr.mxu0 0.0
    %792 = vmatpush1.msra.mxu0 %v115
    %793 = vmatprep.subr.mxu0 0.0
    %794 = vmatpush1.msra.mxu0 %v122
    %795 = vmatprep.subr.mxu0 0.0
    %796 = vmatpush1.msra.mxu0 %v129
    %797 = vmatprep.subr.mxu0 0.0
    %798 = vmatpush1.msra.mxu0 %v136
    %799 = vmatprep.subr.mxu0 0.0
    %800 = vmatpush1.msra.mxu0 %v143
    %801 = vmatprep.subr.mxu0 0.0
    %802 = vmatpush1.msra.mxu0 %v150
    %803 = vmatprep.subr.mxu0 0.0
    %804 = vmatpush1.msra.mxu0 %v157
    %805 = vmatprep.subr.mxu0 0.0
    %806 = vmatpush1.msra.mxu0 %v164
    %807 = vmatprep.subr.mxu0 0.0
    %808 = vmatpush1.msra.mxu0 %v171
    %809 = vmatprep.subr.mxu0 0.0
    %810 = vmatpush1.msra.mxu0 %v178
    %811 = vmatprep.subr.mxu0 0.0
    %812 = vmatpush1.msra.mxu0 %v185
    %813 = vmatprep.subr.mxu0 0.0
    %814 = vmatpush1.msra.mxu0 %v192
    %815 = vmatprep.subr.mxu0 0.0
    %816 = vmatpush1.msra.mxu0 %v199
    %817 = vmatprep.subr.mxu0 0.0
    %818 = vmatpush1.msra.mxu0 %v206
    %819 = vmatprep.subr.mxu0 0.0
    %820 = vmatpush1.msra.mxu0 %v213
    %821 = vmatprep.subr.mxu0 0.0
    %822 = vmatpush1.msra.mxu0 %v220
    %823 = vmatprep.subr.mxu0 0.0
    %824 = vmatpush1.msra.mxu0 %v227
    %825 = vmatprep.subr.mxu0 0.0
    %826 = vmatpush1.msra.mxu0 %v234
    %827 = vmatprep.subr.mxu0 0.0
    %828 = vmatpush1.msra.mxu0 %v241
    %829 = vmatprep.subr.mxu0 0.0
    %830 = vmatpush1.msra.mxu0 %v248
    %831 = vmatprep.subr.mxu0 0.0
    %832 = vmatpush1.msra.mxu0 %v255
    %833 = vmatprep.mubr.f32.mxu0 %v337
    %834 = vmatmul.mubr.f32.gmra.mrb[0].mxu0 %v329
    %v835 = vpop.f32.mrb[0].mxu0
    %v836 = vadd.f32 %v313, %v835
    %v837 = vpop.f32.mrb[0].mxu0
    %838 = vdwg.mxu0
    %839 = vmatprep.subr.mxu0 0.0
    %840 = vmatpush1.msra.mxu0 %v262
    %841 = vmatprep.subr.mxu0 0.0
    %842 = vmatpush1.msra.mxu0 %v269
    %843 = vmatprep.subr.mxu0 0.0
    %844 = vmatpush1.msra.mxu0 %v276
    %845 = vmatprep.subr.mxu0 0.0
    %846 = vmatpush1.msra.mxu0 %v283
    %847 = vmatprep.subr.mxu0 0.0
    %848 = vmatpush1.msra.mxu0 0.0
    %849 = vmatprep.subr.mxu0 0.0
    %850 = vmatpush1.msra.mxu0 0.0
    %851 = vmatprep.subr.mxu0 0.0
    %852 = vmatpush1.msra.mxu0 0.0
    %853 = vmatprep.subr.mxu0 0.0
    %854 = vmatpush1.msra.mxu0 0.0
    %855 = vmatprep.subr.mxu0 0.0
    %856 = vmatpush1.msra.mxu0 0.0
    %857 = vmatprep.subr.mxu0 0.0
    %858 = vmatpush1.msra.mxu0 0.0
    %859 = vmatprep.subr.mxu0 0.0
    %860 = vmatpush1.msra.mxu0 0.0
    %861 = vmatprep.subr.mxu0 0.0
    %862 = vmatpush1.msra.mxu0 0.0
    %863 = vmatprep.subr.mxu0 0.0
    %864 = vmatpush1.msra.mxu0 0.0
    %865 = vmatprep.subr.mxu0 0.0
    %866 = vmatpush1.msra.mxu0 0.0
    %867 = vmatprep.subr.mxu0 0.0
    %868 = vmatpush1.msra.mxu0 0.0
    %869 = vmatprep.subr.mxu0 0.0
    %870 = vmatpush1.msra.mxu0 0.0
    %871 = vmatprep.subr.mxu0 0.0
    %872 = vmatpush1.msra.mxu0 0.0
    %873 = vmatprep.subr.mxu0 0.0
    %874 = vmatpush1.msra.mxu0 0.0
    %875 = vmatprep.subr.mxu0 0.0
    %876 = vmatpush1.msra.mxu0 0.0
    %877 = vmatprep.subr.mxu0 0.0
    %878 = vmatpush1.msra.mxu0 0.0
    %879 = vmatprep.subr.mxu0 0.0
    %880 = vmatpush1.msra.mxu0 0.0
    %881 = vmatprep.subr.mxu0 0.0
    %882 = vmatpush1.msra.mxu0 0.0
    %883 = vmatprep.subr.mxu0 0.0
    %884 = vmatpush1.msra.mxu0 0.0
    %885 = vmatprep.subr.mxu0 0.0
    %886 = vmatpush1.msra.mxu0 0.0
    %887 = vmatprep.subr.mxu0 0.0
    %888 = vmatpush1.msra.mxu0 0.0
    %889 = vmatprep.subr.mxu0 0.0
    %890 = vmatpush1.msra.mxu0 0.0
    %891 = vmatprep.subr.mxu0 0.0
    %892 = vmatpush1.msra.mxu0 0.0
    %893 = vmatprep.subr.mxu0 0.0
    %894 = vmatpush1.msra.mxu0 0.0
    %895 = vmatprep.subr.mxu0 0.0
    %896 = vmatpush1.msra.mxu0 0.0
    %897 = vmatprep.subr.mxu0 0.0
    %898 = vmatpush1.msra.mxu0 0.0
    %899 = vmatprep.subr.mxu0 0.0
    %900 = vmatpush1.msra.mxu0 0.0
    %901 = vmatprep.subr.mxu0 0.0
    %902 = vmatpush1.msra.mxu0 0.0
    %903 = vmatprep.mubr.f32.mxu0 0.0
    %904 = vmatmul.mubr.f32.gmra.mrb[0].mxu0 %v341
    %v905 = vpop.f32.mrb[0].mxu0
    %v906 = vadd.f32 %v836, %v905
    %v907 = vpop.f32.mrb[0].mxu0
    %908 = vdwg.mxu0
    %v914 = vcombine.low %v481, %v483
    %v915 = vcombine.low %v623, %v625
    %v917 = vunpack.c.l.s4 1983009808
    %v918 = vunpack.c.0.s8 %v917
    %v919 = vlaneseq
    %v920 = vshrl.u32 %v919, 7
    %v921 = vsub.s32 %v918, %v920
    %v922 = vrot.slane %v914, %v921
    %v924 = vunpack.c.l.s4 1983009808
    %v925 = vunpack.c.0.s8 %v924
    %v926 = vlaneseq
    %v927 = vshrl.u32 %v926, 7
    %v928 = vsub.s32 %v925, %v927
    %v929 = vrot.slane %v915, %v928
    %v930 = vcombine.low %v922, %v929
    %v932 = vunpack.c.l.s4 1983009808
    %v933 = vunpack.c.0.s8 %v932
    %v934 = vlaneseq
    %v935 = vshrl.u32 %v934, 7
    %v936 = vsub.s32 %v933, %v935
    %v937 = vrot.slane %v765, %v936
    %940 = vst [vmem:[%s3] sm:$0xff] %v930
    %vm941 = vcmask 517120
    %942 = vst.msk [vmem:[%s3 + $0x8] sm:$0x3] %vm941, %v937
    %943 = vst.msk [vmem:[%s4] sm:$0x3] %vm941, %v767
    %vm944 = vcmask 123904
    %945 = vst.msk [vmem:[%s5] sm:$0x3] %vm944, %v906
    // Predicated region
    $region18: #{kernel_predictor_forward.1} parent=1 // pred_check
      _
    $region19: #{kernel_predictor_forward.1} parent=1 // pred_check_branch
      %947 = sbr.rel (0) target = $region21
    $region20: #{kernel_predictor_forward.1} parent=1 // pred_region
      _
    $region21: #{kernel_predictor_forward.1} parent=1 // pred_fallthru
      _
    // Predicated region
    $region22: #{kernel_predictor_forward.1} parent=1 // pred_check
      _
    $region23: #{kernel_predictor_forward.1} parent=1 // pred_check_branch
      %949 = sbr.rel (0) target = $region25
    $region24: #{kernel_predictor_forward.1} parent=1 // pred_region
      _
    $region25: #{kernel_predictor_forward.1} parent=1 // pred_fallthru
      _
    // Predicated region
    $region26: #{kernel_predictor_forward.1} parent=1 // pred_check
      _
    $region27: #{kernel_predictor_forward.1} parent=1 // pred_check_branch
      %951 = sbr.rel (0) target = $region29
    $region28: #{kernel_predictor_forward.1} parent=1 // pred_region
      _
    $region29: #{kernel_predictor_forward.1} parent=1 // pred_fallthru
      _
    // Predicated region
    $region30: #{kernel_predictor_forward.1} parent=1 // pred_check
      _
    $region31: #{kernel_predictor_forward.1} parent=1 // pred_check_branch
      %953 = sbr.rel (0) target = $region33
    $region32: #{kernel_predictor_forward.1} parent=1 // pred_region
      _
    $region33: #{kernel_predictor_forward.1} parent=1 // pred_fallthru
      _
    // Predicated region
    $region34: #{kernel_predictor_forward.1} parent=1 // pred_check
      _
    $region35: #{kernel_predictor_forward.1} parent=1 // pred_check_branch
      %955 = sbr.rel (0) target = $region37
    $region36: #{kernel_predictor_forward.1} parent=1 // pred_region
      _
    $region37: #{kernel_predictor_forward.1} parent=1 // pred_fallthru
      _
    // Predicated region
    $region38: #{kernel_predictor_forward.1} parent=1 // pred_check
      _
    $region39: #{kernel_predictor_forward.1} parent=1 // pred_check_branch
      %957 = sbr.rel (0) target = $region41
    $region40: #{kernel_predictor_forward.1} parent=1 // pred_region
      _
    $region41: #{kernel_predictor_forward.1} parent=1 // pred_fallthru
      _
    %958 = vsyncpa [#allocation3], 1

</llo_original>
